<compile_context>
chip_gen: v6e
topology: v6e:2x2x1
jax: 0.10.0
libtpu: 0.0.40
codegen_flags: <defaults>
</compile_context>

<pallas_src>
import math

import jax
import jax.numpy as jnp
from jax.experimental import pallas as pl
from jax.experimental.pallas import tpu as pltpu

_VMEM_LIMIT = 48 * 1024 * 1024   # scoped-VMEM budget: <= v7x 64 MiB/TC, OK on v5e/v6e


def _cdiv(a, b):
    return -(-a // b)


def _round_up(x, m):
    return _cdiv(x, m) * m


# ---------------------------------------------------------------------------
# In-kernel math helpers (always f32 — v5e has no bf16 VPU/EUP)
# ---------------------------------------------------------------------------
def _erf_f32(x):
    # Abramowitz & Stegun 7.1.26 rational approximation, |err| < 1.5e-7.
    a1, a2, a3, a4, a5 = (0.254829592, -0.284496736, 1.421413741,
                          -1.453152027, 1.061405429)
    p = 0.3275911
    sgn = jnp.where(x >= 0.0, 1.0, -1.0)
    ax = jnp.abs(x)
    t = 1.0 / (1.0 + p * ax)
    poly = ((((a5 * t + a4) * t + a3) * t + a2) * t + a1) * t
    return sgn * (1.0 - poly * jnp.exp(-ax * ax))


_INV_SQRT2 = 1.0 / math.sqrt(2.0)


def _gelu_exact(x):
    # matches torch.nn.GELU() (erf formulation, approximate='none')
    return 0.5 * x * (1.0 + _erf_f32(x * _INV_SQRT2))


# ---------------------------------------------------------------------------
# Pallas kernels
# ---------------------------------------------------------------------------
def _conv0_kernel(x_ref, w_ref, y_ref, sum_ref, ssq_ref):
    # Layer 0 (Cin=1): single K=k contraction on the im2col'd waveform tile.
    # Also emits per-tile GroupNorm partial statistics from the f32 accumulator
    # (never from the rounded stored activation).
    acc = jnp.dot(x_ref[0], w_ref[...], preferred_element_type=jnp.float32)
    y_ref[0] = acc.astype(y_ref.dtype)
    sum_ref[0, 0] = jnp.sum(acc, axis=0, keepdims=True)       # (1, C)
    ssq_ref[0, 0] = jnp.sum(acc * acc, axis=0, keepdims=True)  # (1, C)


def _make_conv_kernel(q_taps, fuse_gn, compute_dtype):
    """Strided Conv1d (space-to-depth form) + GELU epilogue.

    Optional fused prologue (layer 1 only): GroupNorm affine + GELU applied to
    the raw layer-0 conv output as per-column scale/shift vectors.
    """
    def kernel(*refs):
        i = 0
        xm_ref = refs[i]; i += 1
        halo_ref = None
        if q_taps > 1:
            halo_ref = refs[i]; i += 1
        if fuse_gn:
            sc_ref, sh_ref = refs[i], refs[i + 1]; i += 2
        w_ref, o_ref = refs[i], refs[i + 1]

        if fuse_gn:
            def prep(v):
                v = _gelu_exact(v.astype(jnp.float32) * sc_ref[0] + sh_ref[0])
                return v.astype(compute_dtype)
        else:
            def prep(v):
                return v           # already stored in compute_dtype

        xm = prep(xm_ref[0])                                   # (tm, K2), aligned
        acc = jnp.dot(xm, w_ref[0], preferred_element_type=jnp.float32)
        if q_taps > 1:
            hal = prep(halo_ref[0, 0:q_taps - 1])              # (Q-1, K2)
            for q in range(1, q_taps):                         # static unroll
                # Aligned MXU operands; the shift to output row t <- row t+q is
                # done on the (tm, Cout) f32 partial, off the operand path.
                p = jnp.dot(xm, w_ref[q], preferred_element_type=jnp.float32)
                ph = jnp.dot(hal[0:q], w_ref[q],
                             preferred_element_type=jnp.float32)
                acc = acc + jnp.concatenate([p[q:], ph], axis=0)
        o_ref[0] = _gelu_exact(acc).astype(o_ref.dtype)
    return kernel


def _gn_apply_kernel(y_ref, sc_ref, sh_ref, o_ref):
    # Standalone GroupNorm-apply + GELU (only used if the stack has 1 layer).
    y = y_ref[0].astype(jnp.float32)
    o_ref[0] = _gelu_exact(y * sc_ref[0] + sh_ref[0]).astype(o_ref.dtype)


# ---------------------------------------------------------------------------
# pallas_call wrappers
# ---------------------------------------------------------------------------
def _conv_layer0(x_im, w0, *, nt, tm, act_dtype):
    B, rows, k = x_im.shape
    c = w0.shape[-1]
    return pl.pallas_call(
        _conv0_kernel,
        out_shape=(jax.ShapeDtypeStruct((B, rows, c), act_dtype),
                   jax.ShapeDtypeStruct((B, nt, 1, c), jnp.float32),
                   jax.ShapeDtypeStruct((B, nt, 1, c), jnp.float32)),
        grid=(B, nt),
        in_specs=[pl.BlockSpec((1, tm, k), lambda b, i: (b, i, 0)),
                  pl.BlockSpec((k, c), lambda b, i: (0, 0))],
        out_specs=(pl.BlockSpec((1, tm, c), lambda b, i: (b, i, 0)),
                   pl.BlockSpec((1, 1, 1, c), lambda b, i: (b, i, 0, 0)),
                   pl.BlockSpec((1, 1, 1, c), lambda b, i: (b, i, 0, 0))),
        compiler_params=pltpu.CompilerParams(
            dimension_semantics=("parallel", "parallel"),
            vmem_limit_bytes=_VMEM_LIMIT),
    )(x_im, w0)


def _conv_layer(x_r, w2, gn_scale, gn_shift, *, nt_c, nt_total, tm,
                compute_dtype, fuse_gn):
    B, p_rows, k2 = x_r.shape
    q_taps, _, c = w2.shape
    kernel = _make_conv_kernel(q_taps, fuse_gn, compute_dtype)

    # Tiles >= nt_c are "filler" tiles: their input index is clamped to the
    # last compute block; their (finite) rows are never read by valid rows.
    in_specs = [pl.BlockSpec((1, tm, k2),
                             lambda b, i: (b, jnp.minimum(i, nt_c - 1), 0))]
    args = [x_r]
    if q_taps > 1:
        hb = tm // 8
        in_specs.append(pl.BlockSpec(
            (1, 8, k2), lambda b, i: (b, jnp.minimum(i + 1, nt_c) * hb, 0)))
        args.append(x_r)          # halo rows come from a 2nd view of the input
    if fuse_gn:
        in_specs += [pl.BlockSpec((1, 1, k2), lambda b, i: (b, 0, 0)),
                     pl.BlockSpec((1, 1, k2), lambda b, i: (b, 0, 0))]
        args += [gn_scale, gn_shift]
    in_specs.append(pl.BlockSpec((q_taps, k2, c), lambda b, i: (0, 0, 0)))
    args.append(w2)

    return pl.pallas_call(
        kernel,
        out_shape=jax.ShapeDtypeStruct((B, nt_total * tm, c), compute_dtype),
        grid=(B, nt_total),
        in_specs=in_specs,
        out_specs=pl.BlockSpec((1, tm, c), lambda b, i: (b, i, 0)),
        compiler_params=pltpu.CompilerParams(
            dimension_semantics=("parallel", "parallel"),
            vmem_limit_bytes=_VMEM_LIMIT),
    )(*args)


def _gn_apply_gelu(y, scale, shift, *, nt, tm):
    B, rows, c = y.shape
    return pl.pallas_call(
        _gn_apply_kernel,
        out_shape=jax.ShapeDtypeStruct((B, rows, c), y.dtype),
        grid=(B, nt),
        in_specs=[pl.BlockSpec((1, tm, c), lambda b, i: (b, i, 0)),
                  pl.BlockSpec((1, 1, c), lambda b, i: (b, 0, 0)),
                  pl.BlockSpec((1, 1, c), lambda b, i: (b, 0, 0))],
        out_specs=pl.BlockSpec((1, tm, c), lambda b, i: (b, i, 0)),
        compiler_params=pltpu.CompilerParams(
            dimension_semantics=("parallel", "parallel"),
            vmem_limit_bytes=_VMEM_LIMIT),
    )(y, scale.astype(jnp.float32), shift.astype(jnp.float32))


# ---------------------------------------------------------------------------
# Parameters
# ---------------------------------------------------------------------------
def init_params(key, conv_layers):
    """PyTorch-layout parameters: conv weights (Cout, Cin, k) + GroupNorm affine."""
    ws = []
    in_d = 1
    for (dim, k, _s) in conv_layers:
        key, sub = jax.random.split(key)
        std = math.sqrt(2.0 / (in_d * k))     # nn.init.kaiming_normal_ (fan_in, a=0)
        ws.append(jax.random.normal(sub, (dim, in_d, k), jnp.float32) * std)
        in_d = dim
    gn_dim = conv_layers[0][0]
    return {"conv_w": ws,
            "gn_gamma": jnp.ones((gn_dim,), jnp.float32),
            "gn_beta": jnp.zeros((gn_dim,), jnp.float32)}


def prepare_kernel_params(params, conv_layers, dtype=jnp.bfloat16):
    """One-time re-layout AND pre-cast of the conv weights:
       layer 0:  (Cout, 1, k)      -> (k, Cout)                   (im2col path)
       layer>=1: (Cout, Cin, k)    -> (Q, stride*Cin, Cout), zero-padded taps."""
    w2s = []
    in_d = 1
    for li, ((dim, k, stride), w) in enumerate(zip(conv_layers, params["conv_w"])):
        if li == 0:
            assert in_d == 1, "first conv always has Cin=1 (x.unsqueeze(1))"
            w2 = jnp.transpose(w[:, 0, :], (1, 0))            # (k, Cout)
        else:
            q = _cdiv(k, stride)
            w_pad = jnp.pad(w, ((0, 0), (0, 0), (0, q * stride - k)))
            w2 = (w_pad.reshape(dim, in_d, q, stride)
                  .transpose(2, 3, 1, 0)                       # (Q, s, Cin, Cout)
                  .reshape(q, stride * in_d, dim))             # col = off*Cin + c
        w2s.append(w2.astype(dtype))
        in_d = dim
    return {"conv_w2": w2s,
            "gn_gamma": params["gn_gamma"].astype(jnp.float32),
            "gn_beta": params["gn_beta"].astype(jnp.float32)}


# ---------------------------------------------------------------------------
# Full forward
# ---------------------------------------------------------------------------
def conv_feature_extraction_forward(x, kparams, conv_layers, mode="default",
                                    compute_dtype=jnp.bfloat16, tile_m=1024):
    """x: (B, T) waveform -> (B, C_last, T_last), matching the PyTorch module."""
    assert mode == "default"  # TODO(synk): mode='layer_norm' not implemented.
    B, T = x.shape
    n = len(conv_layers)
    ks = [c[1] for c in conv_layers]
    ss = [c[2] for c in conv_layers]
    dims = [c[0] for c in conv_layers]

    # ---- static schedule ---------------------------------------------------
    t_outs, t_in = [], T
    for k, s in zip(ks, ss):
        t_out = (t_in - k) // s + 1
        assert t_out > 0, "input too short for the conv stack"
        t_outs.append(t_out)
        t_in = t_out
    qs = [_cdiv(k, s) for k, s in zip(ks, ss)]

    tms, nt_cs = [], []
    for i in range(n):
        # tm multiple of 8*stride(next layer) so the next space-to-depth
        # reshape and its 8-row halo blocks stay aligned.
        g = 8 * (ss[i + 1] if i + 1 < n else 1)
        tm = max(g, min(_round_up(tile_m, g), _round_up(t_outs[i], g)))
        tms.append(tm)
        nt_cs.append(_cdiv(t_outs[i], tm))
    m_pads = [nt_cs[i] * tms[i] for i in range(n)]

    # Output buffer row counts, sized so the next layer's main + halo blocks
    # are in bounds -> no inter-layer jnp.pad copies.
    l_bufs = [0] * n
    l_bufs[n - 1] = m_pads[n - 1]
    for i in range(n - 1, 0, -1):
        p_req = m_pads[i] + (8 if qs[i] > 1 else 0)
        l_bufs[i - 1] = _round_up(max(m_pads[i - 1], p_req * ss[i]), tms[i - 1])
    nt_tots = [l_bufs[i] // tms[i] for i in range(n)]

    # ---- layer 0: tiny im2col + conv + fused GroupNorm partial stats --------
    k0, s0, c0 = ks[0], ss[0], dims[0]
    rows0 = l_bufs[0]
    need = (rows0 - 1) * s0 + k0
    xp = jnp.pad(x.astype(jnp.float32), ((0, 0), (0, max(0, need - T))))
    gat = (jnp.arange(rows0) * s0)[:, None] + jnp.arange(k0)[None, :]
    x_im = xp[:, gat]                                          # (B, rows0, k0)
    # Rows >= t_out are exact zeros: they contribute nothing to the GroupNorm
    # statistics and keep all padded regions finite through the stack.
    x_im = jnp.where((jnp.arange(rows0) < t_outs[0])[None, :, None], x_im, 0.0)
    x_im = x_im.astype(compute_dtype)

    y, psum, pssq = _conv_layer0(x_im, kparams["conv_w2"][0],
                                 nt=nt_tots[0], tm=tms[0],
                                 act_dtype=compute_dtype)

    # GroupNorm(dim, dim) == per-(batch, channel) normalization over time; the
    # statistics come from f32 partial sums (pad rows contribute exactly 0).
    inv_t = 1.0 / float(t_outs[0])
    mean = jnp.sum(psum[:, :, 0, :], axis=1) * inv_t           # (B, C)
    var = jnp.sum(pssq[:, :, 0, :], axis=1) * inv_t - mean * mean
    inv_std = jax.lax.rsqrt(var + 1e-5)
    gn_scale = kparams["gn_gamma"][None, :] * inv_std          # (B, C)
    gn_shift = kparams["gn_beta"][None, :] - mean * gn_scale

    if n == 1:
        y = _gn_apply_gelu(y, gn_scale[:, None, :], gn_shift[:, None, :],
                           nt=nt_tots[0], tm=tms[0])
        return jnp.transpose(y[:, :t_outs[0], :].astype(jnp.float32), (0, 2, 1))

    # ---- layers >= 1 --------------------------------------------------------
    in_d = c0
    for i in range(1, n):
        dim, _k, s = conv_layers[i]
        x_r = y.reshape(B, l_bufs[i - 1] // s, s * in_d)       # free reshape
        fuse = (i == 1)     # GN affine + GELU fused into layer-1's input path
        if fuse:
            sc = jnp.tile(gn_scale, (1, s))[:, None, :].astype(jnp.float32)
            sh = jnp.tile(gn_shift, (1, s))[:, None, :].astype(jnp.float32)
        else:
            sc = sh = None
        # Dropout(p=0.0) is the identity and is omitted.
        y = _conv_layer(x_r, kparams["conv_w2"][i], sc, sh,
                        nt_c=nt_cs[i], nt_total=nt_tots[i], tm=tms[i],
                        compute_dtype=compute_dtype, fuse_gn=fuse)
        in_d = dim

    out = y[:, :t_outs[-1], :].astype(jnp.float32)
    return jnp.transpose(out, (0, 2, 1))                       # (B, C, T') NCT


# ---------------------------------------------------------------------------
# Pure-JAX reference (correctness check against standard ops)
# ---------------------------------------------------------------------------
def reference_forward(x, params, conv_layers, mode="default"):
    h = x[:, None, :]                                          # (B, 1, T)
    for i, ((dim, k, stride), w) in enumerate(zip(conv_layers, params["conv_w"])):
        h = jax.lax.conv_general_dilated(
            h, w, window_strides=(stride,), padding="VALID",
            dimension_numbers=("NCH", "OIH", "NCH"))
        if mode == "default" and i == 0:
            mean = jnp.mean(h, axis=2, keepdims=True)
            var = jnp.mean((h - mean) ** 2, axis=2, keepdims=True)
            hn = (h - mean) * jax.lax.rsqrt(var + 1e-5)
            gamma = params["gn_gamma"].reshape(1, -1, 1)
            beta = params["gn_beta"].reshape(1, -1, 1)
            h = hn * gamma + beta
        h = jax.nn.gelu(h, approximate=False)
    return h


# ---------------------------------------------------------------------------
if __name__ == "__main__":
    # Small, WavLM-like conv stack: (dim, kernel, stride)
    conv_layers = [(32, 10, 5), (32, 3, 2), (32, 2, 2)]
    B, T = 2, 400

    key = jax.random.PRNGKey(0)
    k_params, k_x = jax.random.split(key)
    params = init_params(k_params, conv_layers)
    x = jax.random.normal(k_x, (B, T), jnp.float32)

    ref = reference_forward(x, params, conv_layers)

    # f32 path (tight tolerance). tile_m=64 exercises multi-tile + halo paths.
    kparams32 = prepare_kernel_params(params, conv_layers, dtype=jnp.float32)
    out32 = conv_feature_extraction_forward(
        x, kparams32, conv_layers, compute_dtype=jnp.float32, tile_m=64)
    out32 = jax.block_until_ready(out32)
    assert out32.shape == ref.shape == (2, 32, 19), (out32.shape, ref.shape)
    assert jnp.allclose(out32, ref, atol=2e-4, rtol=2e-4), float(
        jnp.max(jnp.abs(out32 - ref)))

    # f32 path with tiny tiles: exercises the filler-tile / clamped-index path.
    out32b = conv_feature_extraction_forward(
        x, kparams32, conv_layers, compute_dtype=jnp.float32, tile_m=16)
    out32b = jax.block_until_ready(out32b)
    assert jnp.allclose(out32b, ref, atol=2e-4, rtol=2e-4), float(
        jnp.max(jnp.abs(out32b - ref)))

    # Default path: bf16 MXU operands + bf16 stored activations, f32
    # accumulation and f32 GroupNorm statistics.
    kparams16 = prepare_kernel_params(params, conv_layers, dtype=jnp.bfloat16)
    out16 = conv_feature_extraction_forward(
        x, kparams16, conv_layers, compute_dtype=jnp.bfloat16)
    out16 = jax.block_until_ready(out16)
    assert out16.shape == ref.shape
    assert jnp.allclose(out16, ref, atol=1e-1, rtol=1e-1), float(
        jnp.max(jnp.abs(out16 - ref)))

    print("KERNEL_OK")
</pallas_src>

<mosaic_0001>
module attributes {stable_mosaic.version = 11 : i64} {
  func.func @_conv0_kernel(%arg0: i32, %arg1: i32, %arg2: memref<1x64x10xf32, #tpu.memory_space<vmem>>, %arg3: memref<10x32xf32, #tpu.memory_space<vmem>>, %arg4: memref<1x64x32xf32, #tpu.memory_space<vmem>>, %arg5: memref<1x1x1x32xf32, #tpu.memory_space<vmem>>, %arg6: memref<1x1x1x32xf32, #tpu.memory_space<vmem>>) attributes {dimension_semantics = [#tpu.dimension_semantics<parallel>, #tpu.dimension_semantics<parallel>], iteration_bounds = array<i64: 2, 2>, scalar_prefetch = 0 : i64, scratch_operands = 0 : i64, tpu.core_type = #tpu.core_type<tc>, window_params = [{transform_indices = @transform_0, window_bounds = array<i64: 1, 64, 10>}, {pipeline_mode = #tpu.pipeline_mode<synchronous>, transform_indices = @transform_1, window_bounds = array<i64: 10, 32>}, {transform_indices = @transform_2, window_bounds = array<i64: 1, 64, 32>}, {transform_indices = @transform_3, window_bounds = array<i64: 1, 1, 1, 32>}, {transform_indices = @transform_4, window_bounds = array<i64: 1, 1, 1, 32>}]} {
    %c0 = arith.constant 0 : index
    %c0_0 = arith.constant 0 : index
    %c0_1 = arith.constant 0 : index
    %0 = vector.load %arg2[%c0, %c0_0, %c0_1] : memref<1x64x10xf32, #tpu.memory_space<vmem>>, vector<1x64x10xf32>
    %1 = vector.shape_cast %0 : vector<1x64x10xf32> to vector<64x10xf32>
    %c0_2 = arith.constant 0 : index
    %c0_3 = arith.constant 0 : index
    %2 = vector.load %arg3[%c0_2, %c0_3] : memref<10x32xf32, #tpu.memory_space<vmem>>, vector<10x32xf32>
    %cst = arith.constant dense<0.000000e+00> : vector<64x32xf32>
    %3 = tpu.matmul %1, %2, %cst {dimension_numbers = #tpu.dot_dimension_numbers<[1], [0], [0], [1], [0, 0, 1, 1], [], []>} : vector<64x10xf32>, vector<10x32xf32>, vector<64x32xf32> -> vector<64x32xf32>
    %c0_4 = arith.constant 0 : index
    %c0_5 = arith.constant 0 : index
    %c0_6 = arith.constant 0 : index
    %4 = vector.load %arg4[%c0_4, %c0_5, %c0_6] : memref<1x64x32xf32, #tpu.memory_space<vmem>>, vector<1x64x32xf32>
    %5 = vector.shape_cast %4 : vector<1x64x32xf32> to vector<64x32xf32>
    %6 = vector.shape_cast %3 : vector<64x32xf32> to vector<1x64x32xf32>
    tpu.vector_store %arg4[%c0_4, %c0_5, %c0_6], %6 {strides = array<i32>} : memref<1x64x32xf32, #tpu.memory_space<vmem>>, vector<1x64x32xf32>,
    %cst_7 = arith.constant dense<0.000000e+00> : vector<32xf32>
    %7 = vector.multi_reduction <add>, %3, %cst_7 [0] : vector<64x32xf32> to vector<32xf32>
    %8 = vector.shape_cast %7 : vector<32xf32> to vector<1x32xf32>
    %c0_8 = arith.constant 0 : index
    %c0_9 = arith.constant 0 : index
    %c0_10 = arith.constant 0 : index
    %c0_11 = arith.constant 0 : index
    %9 = vector.load %arg5[%c0_8, %c0_9, %c0_10, %c0_11] : memref<1x1x1x32xf32, #tpu.memory_space<vmem>>, vector<1x1x1x32xf32>
    %10 = vector.shape_cast %9 : vector<1x1x1x32xf32> to vector<1x32xf32>
    %11 = vector.shape_cast %8 : vector<1x32xf32> to vector<1x1x1x32xf32>
    tpu.vector_store %arg5[%c0_8, %c0_9, %c0_10, %c0_11], %11 {strides = array<i32>} : memref<1x1x1x32xf32, #tpu.memory_space<vmem>>, vector<1x1x1x32xf32>,
    %12 = arith.mulf %3, %3 : vector<64x32xf32>
    %cst_12 = arith.constant dense<0.000000e+00> : vector<32xf32>
    %13 = vector.multi_reduction <add>, %12, %cst_12 [0] : vector<64x32xf32> to vector<32xf32>
    %14 = vector.shape_cast %13 : vector<32xf32> to vector<1x32xf32>
    %c0_13 = arith.constant 0 : index
    %c0_14 = arith.constant 0 : index
    %c0_15 = arith.constant 0 : index
    %c0_16 = arith.constant 0 : index
    %15 = vector.load %arg6[%c0_13, %c0_14, %c0_15, %c0_16] : memref<1x1x1x32xf32, #tpu.memory_space<vmem>>, vector<1x1x1x32xf32>
    %16 = vector.shape_cast %15 : vector<1x1x1x32xf32> to vector<1x32xf32>
    %17 = vector.shape_cast %14 : vector<1x32xf32> to vector<1x1x1x32xf32>
    tpu.vector_store %arg6[%c0_13, %c0_14, %c0_15, %c0_16], %17 {strides = array<i32>} : memref<1x1x1x32xf32, #tpu.memory_space<vmem>>, vector<1x1x1x32xf32>,
    return
  }
  func.func @transform_0(%arg0: i32, %arg1: i32) -> (i32, i32, i32) {
    %c0_i32 = arith.constant 0 : i32
    %c0_i32_0 = arith.constant 0 : i32
    return %arg0, %arg1, %c0_i32 : i32, i32, i32
  }
  func.func @transform_1(%arg0: i32, %arg1: i32) -> (i32, i32) {
    %c0_i32 = arith.constant 0 : i32
    %c0_i32_0 = arith.constant 0 : i32
    %c0_i32_1 = arith.constant 0 : i32
    return %c0_i32, %c0_i32_0 : i32, i32
  }
  func.func @transform_2(%arg0: i32, %arg1: i32) -> (i32, i32, i32) {
    %c0_i32 = arith.constant 0 : i32
    %c0_i32_0 = arith.constant 0 : i32
    return %arg0, %arg1, %c0_i32 : i32, i32, i32
  }
  func.func @transform_3(%arg0: i32, %arg1: i32) -> (i32, i32, i32, i32) {
    %c0_i32 = arith.constant 0 : i32
    %c0_i32_0 = arith.constant 0 : i32
    %c0_i32_1 = arith.constant 0 : i32
    return %arg0, %arg1, %c0_i32, %c0_i32_0 : i32, i32, i32, i32
  }
  func.func @transform_4(%arg0: i32, %arg1: i32) -> (i32, i32, i32, i32) {
    %c0_i32 = arith.constant 0 : i32
    %c0_i32_0 = arith.constant 0 : i32
    %c0_i32_1 = arith.constant 0 : i32
    return %arg0, %arg1, %c0_i32, %c0_i32_0 : i32, i32, i32, i32
  }
}

</mosaic_0001>

<llo_original>
// kernel: tpu_custom_call.1
$region0: #{tpu_custom_call.1}
  #allocation0 [shape = 'u32[]', space=smem, size = 0x4, offset = 0x4, fixed_abs, tag = 'smem constant byte address 0x4 - core index']
  #allocation1 [shape = 'u32[144,128]{1,0:T(1,128)}', space=vmem, size = 0x12000, scoped, tag = 'internal scratch']
  %s0 = inlined_call_operand.vmem [shape: f32[2,128,10], index: 0, kind: input, shape index: {}]
  %s1 = inlined_call_operand.vmem [shape: f32[10,32], index: 1, kind: input, shape index: {}]
  %s2 = inlined_call_operand.vmem [shape: f32[2,128,32], index: 2, kind: output, shape index: {0}]
  %s3 = inlined_call_operand.hbm [shape: f32[2,2,1,32], index: 3, kind: output, shape index: {1}]
  %s4 = inlined_call_operand.hbm [shape: f32[2,2,1,32], index: 4, kind: output, shape index: {2}]
  %5 = xla_tuple %s2, %s3, %s4
  %s6 = sld [smem:[#allocation0]]
  $region57: #{tpu_custom_call.1} parent=0
    _
  %s8 = ssub.s32 1, %s6
  %s9 = scalar_select 0, %s8, %s6
  $region1: #{tpu_custom_call.1} parent=0
    #allocation2 [shape = 'u8[1024]{0}', space=vmem, size = 0x400, scoped, tag = 'output window, operand 1']
    #allocation3 [shape = 's32[2]{0}', space=sflag, size = 0x8, scoped, tag = 'scoped memory for tpu_custom_call.1']
    #allocation4 [shape = 'u8[1024]{0}', space=vmem, size = 0x400, scoped, tag = 'output window, operand 2']
    #allocation5 [shape = 's32[2]{0}', space=sflag, size = 0x8, scoped, tag = 'scoped memory for tpu_custom_call.1']
    %10 = vsyncpa [#allocation3], 0
    %s11 = scalar_lea.sflag [#allocation3], 1
    %12 = vsyncpa %s11, 0
    %13 = vsyncpa [#allocation5], 0
    %s14 = scalar_lea.sflag [#allocation5], 1
    %15 = vsyncpa %s14, 0
    loop: start=0, step=1, limit=6
    $region2: #{tpu_custom_call.1} parent=1 // loop_pre_header
      _
    $region3: #{tpu_custom_call.1} parent=1 // loop_header
      %s17 = sphi 0, %s21
      %p18 = scmp.ge.s32.totalorder %s17, 6
      %s24 = sphi 0, %s36
      %s25 = sphi 0, %s32
      %s26 = sphi 0, %s24
      %s27 = sphi 0, %s25
      %s28 = sphi 0, %s26
      %s29 = sphi 0, %s27
      %s41 = sphi 0, %s43
      %s44 = sphi 0, %s41
      %s45 = sphi 0, %s44
      %s61 = sphi 0, %s45
      %s65 = sphi 0, %s65
      %s67 = sphi 0, %s65
      %s68 = sphi 0, %s67
      %s82 = sphi 0, %s68
      %s90 = sphi 0, %s92
      %s93 = sphi 0, %s90
      %s94 = sphi 0, %s93
      %s110 = sphi 0, %s94
      %s118 = sphi 0, %s120
      %s121 = sphi 0, %s118
      %s122 = sphi 0, %s121
      %s138 = sphi 0, %s122
      %s146 = sphi 0, %s148
      %s149 = sphi 0, %s146
      %s150 = sphi 0, %s149
      %s166 = sphi 0, %s150
    $region4: #{tpu_custom_call.1} parent=1 // loop_header_branch
      %20 = sbr.rel (%p18) target = $region8
    $region5: #{tpu_custom_call.1} parent=1 // loop_body
      %s22 = ssub.s32 %s17, 1
      %s23 = ssub.s32 %s17, 2
      %s30 = sadd.s32 1, %s25
      %p31 = scmp.ge.s32.totalorder %s30, 2
      %s32 = scalar_select %p31, 0, %s30
      %s33 = sadd.s32 1, %s24
      %s34 = scalar_select %p31, %s33, %s24
      %p35 = scmp.ge.s32.totalorder %s34, 2
      %s36 = scalar_select %p35, 0, %s34
      %s37 = ssub.s32 %s24, %s36
      %s38 = ssub.s32 %s25, %s32
      %s39 = sor.u32 %s37, %s38
      %p40 = scmp.eq.s32.totalorder %s39, 0
      %s42 = sadd.s32 %s41, 1
      %s43 = scalar_select %p40, %s41, %s42
      %p46 = pneg %p40
      %p47 = scmp.eq.s32.totalorder %s17, 3
      %p48 = por %p46, %p47
      %p49 = scmp.ne.s32.totalorder %s41, %s44
      %p50 = scmp.eq.s32.totalorder %s17, 0
      %p51 = por %p49, %p50
      %p52 = scmp.ne.s32.totalorder %s41, %s44
      %p53 = scmp.eq.s32.totalorder %s22, 3
      %p54 = por %p52, %p53
      %p55 = scmp.ne.s32.totalorder %s44, %s45
      %p56 = scmp.eq.s32.totalorder %s22, 0
      %p57 = por %p55, %p56
      %p58 = scmp.ne.s32.totalorder %s44, %s45
      %p59 = scmp.eq.s32.totalorder %s23, 3
      %p60 = por %p58, %p59
      %p62 = scmp.ne.s32.totalorder %s45, %s61
      %p63 = scmp.eq.s32.totalorder %s23, 0
      %p64 = por %p62, %p63
      %s66 = sadd.s32 %s65, 1
      %p69 = scmp.eq.s32.totalorder %s17, 3
      %p70 = scmp.ne.s32.totalorder %s65, %s67
      %p71 = scmp.eq.s32.totalorder %s17, 0
      %p72 = por %p70, %p71
      %p73 = scmp.ne.s32.totalorder %s65, %s67
      %p74 = scmp.eq.s32.totalorder %s22, 3
      %p75 = por %p73, %p74
      %p76 = scmp.ne.s32.totalorder %s67, %s68
      %p77 = scmp.eq.s32.totalorder %s22, 0
      %p78 = por %p76, %p77
      %p79 = scmp.ne.s32.totalorder %s67, %s68
      %p80 = scmp.eq.s32.totalorder %s23, 3
      %p81 = por %p79, %p80
      %p83 = scmp.ne.s32.totalorder %s68, %s82
      %p84 = scmp.eq.s32.totalorder %s23, 0
      %p85 = por %p83, %p84
      %s86 = ssub.s32 %s24, %s36
      %s87 = ssub.s32 %s25, %s32
      %s88 = sor.u32 %s86, %s87
      %p89 = scmp.eq.s32.totalorder %s88, 0
      %s91 = sadd.s32 %s90, 1
      %s92 = scalar_select %p89, %s90, %s91
      %p95 = pneg %p89
      %p96 = scmp.eq.s32.totalorder %s17, 3
      %p97 = por %p95, %p96
      %p98 = scmp.ne.s32.totalorder %s90, %s93
      %p99 = scmp.eq.s32.totalorder %s17, 0
      %p100 = por %p98, %p99
      %p101 = scmp.ne.s32.totalorder %s90, %s93
      %p102 = scmp.eq.s32.totalorder %s22, 3
      %p103 = por %p101, %p102
      %p104 = scmp.ne.s32.totalorder %s93, %s94
      %p105 = scmp.eq.s32.totalorder %s22, 0
      %p106 = por %p104, %p105
      %p107 = scmp.ne.s32.totalorder %s93, %s94
      %p108 = scmp.eq.s32.totalorder %s23, 3
      %p109 = por %p107, %p108
      %p111 = scmp.ne.s32.totalorder %s94, %s110
      %p112 = scmp.eq.s32.totalorder %s23, 0
      %p113 = por %p111, %p112
      %s114 = ssub.s32 %s24, %s36
      %s115 = ssub.s32 %s25, %s32
      %s116 = sor.u32 %s114, %s115
      %p117 = scmp.eq.s32.totalorder %s116, 0
      %s119 = sadd.s32 %s118, 1
      %s120 = scalar_select %p117, %s118, %s119
      %p123 = pneg %p117
      %p124 = scmp.eq.s32.totalorder %s17, 3
      %p125 = por %p123, %p124
      %p126 = scmp.ne.s32.totalorder %s118, %s121
      %p127 = scmp.eq.s32.totalorder %s17, 0
      %p128 = por %p126, %p127
      %p129 = scmp.ne.s32.totalorder %s118, %s121
      %p130 = scmp.eq.s32.totalorder %s22, 3
      %p131 = por %p129, %p130
      %p132 = scmp.ne.s32.totalorder %s121, %s122
      %p133 = scmp.eq.s32.totalorder %s22, 0
      %p134 = por %p132, %p133
      %p135 = scmp.ne.s32.totalorder %s121, %s122
      %p136 = scmp.eq.s32.totalorder %s23, 3
      %p137 = por %p135, %p136
      %p139 = scmp.ne.s32.totalorder %s122, %s138
      %p140 = scmp.eq.s32.totalorder %s23, 0
      %p141 = por %p139, %p140
      %s142 = ssub.s32 %s24, %s36
      %s143 = ssub.s32 %s25, %s32
      %s144 = sor.u32 %s142, %s143
      %p145 = scmp.eq.s32.totalorder %s144, 0
      %s147 = sadd.s32 %s146, 1
      %s148 = scalar_select %p145, %s146, %s147
      %p151 = pneg %p145
      %p152 = scmp.eq.s32.totalorder %s17, 3
      %p153 = por %p151, %p152
      %p154 = scmp.ne.s32.totalorder %s146, %s149
      %p155 = scmp.eq.s32.totalorder %s17, 0
      %p156 = por %p154, %p155
      %p157 = scmp.ne.s32.totalorder %s146, %s149
      %p158 = scmp.eq.s32.totalorder %s22, 3
      %p159 = por %p157, %p158
      %p160 = scmp.ne.s32.totalorder %s149, %s150
      %p161 = scmp.eq.s32.totalorder %s22, 0
      %p162 = por %p160, %p161
      %p163 = scmp.ne.s32.totalorder %s149, %s150
      %p164 = scmp.eq.s32.totalorder %s23, 3
      %p165 = por %p163, %p164
      %p167 = scmp.ne.s32.totalorder %s150, %s166
      %p168 = scmp.eq.s32.totalorder %s23, 0
      %p169 = por %p167, %p168
      %p170 = scmp.le.s32.totalorder 1, %s17
      %p171 = scmp.lt.s32.totalorder %s17, 5
      %p172 = pnand %p170, %p171
      %p173 = pneg %p172
      // Predicated region
      $region9: #{tpu_custom_call.1} parent=5 // pred_check
        _
      $region10: #{tpu_custom_call.1} parent=5 // pred_check_branch
        %175 = sbr.rel (%p172) target = $region12
      $region11: #{tpu_custom_call.1} parent=5 // pred_region
        %s176 = ssub.s32 %s17, 1
        // Predicated region
        $region13: #{tpu_custom_call.1} parent=11 // pred_check
          %p177 = pneg %p78
        $region14: #{tpu_custom_call.1} parent=11 // pred_check_branch
          %179 = sbr.rel (%p177) target = $region16
        $region15: #{tpu_custom_call.1} parent=11 // pred_region
          _
        $region16: #{tpu_custom_call.1} parent=11 // pred_fallthru
          _
      $region12: #{tpu_custom_call.1} parent=5 // pred_fallthru
        _
      %p180 = scmp.lt.s32.totalorder %s17, 4
      // Predicated region
      $region17: #{tpu_custom_call.1} parent=5 // pred_check
        %p181 = pneg %p180
      $region18: #{tpu_custom_call.1} parent=5 // pred_check_branch
        %183 = sbr.rel (%p181) target = $region20
      $region19: #{tpu_custom_call.1} parent=5 // pred_region
        // Predicated region
        $region21: #{tpu_custom_call.1} parent=19 // pred_check
          %p184 = pneg %p51
        $region22: #{tpu_custom_call.1} parent=19 // pred_check_branch
          %186 = sbr.rel (%p184) target = $region24
        $region23: #{tpu_custom_call.1} parent=19 // pred_region
          %s187 = smul.u32 8, %s25
          %p188 = scmp.lt.s32.totalorder %s24, 1
          %s189 = scalar_select %p188, %s24, 1
          %p190 = scmp.lt.s32.totalorder %s187, 15
          %s191 = scalar_select %p190, %s187, 15
          %s192 = smul.addr %s189, 16
          %s193 = sadd.s32 %s191, %s192
          %s194 = smul.addr %s193, 8
          %s195 = scalar_lea.vmem %s0, %s194
          %s196 = smul.u32 8, %s25
        $region24: #{tpu_custom_call.1} parent=19 // pred_fallthru
          _
      $region20: #{tpu_custom_call.1} parent=5 // pred_fallthru
        _
      %p197 = scmp.le.s32.totalorder 1, %s17
      %p198 = scmp.lt.s32.totalorder %s17, 5
      %p199 = pnand %p197, %p198
      %p200 = pneg %p199
      // Predicated region
      $region25: #{tpu_custom_call.1} parent=5 // pred_check
        _
      $region26: #{tpu_custom_call.1} parent=5 // pred_check_branch
        %202 = sbr.rel (%p199) target = $region28
      $region27: #{tpu_custom_call.1} parent=5 // pred_region
        %s203 = ssub.s32 %s17, 1
        %s204 = smul.u32 8, %s27
        %p205 = scmp.lt.s32.totalorder %s26, 1
        %s206 = scalar_select %p205, %s26, 1
        %p207 = scmp.lt.s32.totalorder %s204, 15
        %s208 = scalar_select %p207, %s204, 15
        %s209 = smul.addr %s206, 16
        %s210 = sadd.s32 %s208, %s209
        %s211 = smul.addr %s210, 8
        %s212 = scalar_lea.vmem %s0, %s211
        %p213 = pneg %p57
        %p214 = pneg %p54
        %p215 = pneg %p78
        %p216 = pneg %p75
        %p217 = pneg %p106
        %p218 = pneg %p103
        %s219 = smul.u32 8, %s27
        %p220 = scmp.lt.s32.totalorder %s26, 1
        %s221 = scalar_select %p220, %s26, 1
        %p222 = scmp.lt.s32.totalorder %s219, 15
        %s223 = scalar_select %p222, %s219, 15
        %s224 = smul.addr %s221, 16
        %s225 = sadd.s32 %s223, %s224
        %s226 = smul.addr %s225, 8
        %s227 = scalar_lea.vmem %s2, %s226
        %p228 = pneg %p134
        %p229 = pneg %p131
        %s230 = sand.u32 %s121, 1
        %s231 = scalar_lea.sflag [#allocation3], %s230
        %s232 = sand.u32 %s121, 1
        %s233 = scalar_lea.vmem [#allocation2], %s232
        %p234 = pneg %p162
        %p235 = pneg %p159
        %s236 = sand.u32 %s149, 1
        %s237 = scalar_lea.sflag [#allocation5], %s236
        %s238 = sand.u32 %s149, 1
        %s239 = scalar_lea.vmem [#allocation4], %s238
        %s240 = smul.u32 8, %s27
        %p241 = scmp.lt.s32.totalorder %s26, 1
        %s242 = scalar_select %p241, %s26, 1
        %p243 = scmp.lt.s32.totalorder %s240, 15
        %s244 = scalar_select %p243, %s240, 15
        %s245 = smul.addr %s242, 16
        %s246 = sadd.s32 %s244, %s245
        %s247 = smul.addr %s246, 8
        %s248 = scalar_lea.vmem %s0, %s247
        %s249 = smul.u32 8, %s27
        %s250 = smul.u32 8, %s27
        %p251 = scmp.lt.s32.totalorder %s26, 1
        %s252 = scalar_select %p251, %s26, 1
        %p253 = scmp.lt.s32.totalorder %s250, 15
        %s254 = scalar_select %p253, %s250, 15
        %s255 = smul.addr %s252, 16
        %s256 = sadd.s32 %s254, %s255
        %s257 = smul.addr %s256, 8
        %s258 = scalar_lea.vmem %s2, %s257
        %s259 = smul.u32 8, %s27
        %v260 = vld [vmem:[%s248] sm:$0xff]
        %v261 = vld [vmem:[%s248 + $0x8] sm:$0xff]
        %v262 = vld [vmem:[%s248 + $0x10] sm:$0xff]
        %v263 = vld [vmem:[%s248 + $0x18] sm:$0xff]
        %v264 = vld [vmem:[%s248 + $0x20] sm:$0xff]
        %v265 = vld [vmem:[%s248 + $0x28] sm:$0xff]
        %v266 = vld [vmem:[%s248 + $0x30] sm:$0xff]
        %v267 = vld [vmem:[%s248 + $0x38] sm:$0xff]
        %v268 = vld [vmem:[%s1] sm:$0xff]
        %v269 = vld [vmem:[%s1 + $0x8] sm:$0x3]
        %vm270 = vcmask 80896
        %v272 = vsel %vm270, %v260, 0
        %v275 = vsel %vm270, %v261, 0
        %v278 = vsel %vm270, %v262, 0
        %v281 = vsel %vm270, %v263, 0
        %v284 = vsel %vm270, %v264, 0
        %v287 = vsel %vm270, %v265, 0
        %v290 = vsel %vm270, %v266, 0
        %v293 = vsel %vm270, %v267, 0
        %vm295 = vcmask 1041408
        %v297 = vsel %vm295, %v269, 0
        %299 = vmatprep.subr.mxu0 0.0
        %300 = vmatpush1.msra.mxu0 0.0
        %301 = vmatprep.subr.mxu0 0.0
        %302 = vmatpush1.msra.mxu0 0.0
        %303 = vmatprep.subr.mxu0 0.0
        %304 = vmatpush1.msra.mxu0 0.0
        %305 = vmatprep.subr.mxu0 0.0
        %306 = vmatpush1.msra.mxu0 0.0
        %307 = vmatprep.subr.mxu0 0.0
        %308 = vmatpush1.msra.mxu0 0.0
        %309 = vmatprep.subr.mxu0 0.0
        %310 = vmatpush1.msra.mxu0 0.0
        %311 = vmatprep.subr.mxu0 0.0
        %312 = vmatpush1.msra.mxu0 0.0
        %313 = vmatprep.subr.mxu0 0.0
        %314 = vmatpush1.msra.mxu0 0.0
        %315 = vmatprep.subr.mxu0 0.0
        %316 = vmatpush1.msra.mxu0 0.0
        %317 = vmatprep.subr.mxu0 0.0
        %318 = vmatpush1.msra.mxu0 0.0
        %319 = vmatprep.subr.mxu0 0.0
        %320 = vmatpush1.msra.mxu0 0.0
        %321 = vmatprep.subr.mxu0 0.0
        %322 = vmatpush1.msra.mxu0 0.0
        %323 = vmatprep.subr.mxu0 0.0
        %324 = vmatpush1.msra.mxu0 0.0
        %325 = vmatprep.subr.mxu0 0.0
        %326 = vmatpush1.msra.mxu0 0.0
        %327 = vmatprep.subr.mxu0 0.0
        %328 = vmatpush1.msra.mxu0 %v297
        %329 = vmatprep.subr.mxu0 0.0
        %330 = vmatpush1.msra.mxu0 %v268
        %331 = vmatprep.subr.mxu0 0.0
        %332 = vmatpush2.msra.mxu0 0.0
        %333 = vmatprep.subr.mxu0 0.0
        %334 = vmatpush2.msra.mxu0 0.0
        %335 = vmatprep.subr.mxu0 0.0
        %336 = vmatpush2.msra.mxu0 0.0
        %337 = vmatprep.subr.mxu0 0.0
        %338 = vmatpush2.msra.mxu0 0.0
        %339 = vmatprep.subr.mxu0 0.0
        %340 = vmatpush2.msra.mxu0 0.0
        %341 = vmatprep.subr.mxu0 0.0
        %342 = vmatpush2.msra.mxu0 0.0
        %343 = vmatprep.subr.mxu0 0.0
        %344 = vmatpush2.msra.mxu0 0.0
        %345 = vmatprep.subr.mxu0 0.0
        %346 = vmatpush2.msra.mxu0 0.0
        %347 = vmatprep.subr.mxu0 0.0
        %348 = vmatpush2.msra.mxu0 0.0
        %349 = vmatprep.subr.mxu0 0.0
        %350 = vmatpush2.msra.mxu0 0.0
        %351 = vmatprep.subr.mxu0 0.0
        %352 = vmatpush2.msra.mxu0 0.0
        %353 = vmatprep.subr.mxu0 0.0
        %354 = vmatpush2.msra.mxu0 0.0
        %355 = vmatprep.subr.mxu0 0.0
        %356 = vmatpush2.msra.mxu0 0.0
        %357 = vmatprep.subr.mxu0 0.0
        %358 = vmatpush2.msra.mxu0 0.0
        %359 = vmatprep.subr.mxu0 0.0
        %360 = vmatpush2.msra.mxu0 0.0
        %361 = vmatprep.subr.mxu0 0.0
        %362 = vmatpush2.msra.mxu0 0.0
        %363 = vmatprep.mubr.f32.mxu0 0.0
        %364 = vmatmul.mubr.f32.gmra.mxu0 %v272
        %v365 = vpop.f32.mrf.mxu0
        %v366 = vadd.f32 0.0, %v365
        %v367 = vpop.f32.mrf.mxu0
        %368 = vmatprep.mubr.f32.mxu0 0.0
        %369 = vmatmul.mubr.f32.gmra.mxu0 %v275
        %v370 = vpop.f32.mrf.mxu0
        %v371 = vadd.f32 0.0, %v370
        %v372 = vpop.f32.mrf.mxu0
        %373 = vmatprep.mubr.f32.mxu0 0.0
        %374 = vmatmul.mubr.f32.gmra.mxu0 %v278
        %v375 = vpop.f32.mrf.mxu0
        %v376 = vadd.f32 0.0, %v375
        %v377 = vpop.f32.mrf.mxu0
        %378 = vmatprep.mubr.f32.mxu0 0.0
        %379 = vmatmul.mubr.f32.gmra.mxu0 %v281
        %v380 = vpop.f32.mrf.mxu0
        %v381 = vadd.f32 0.0, %v380
        %v382 = vpop.f32.mrf.mxu0
        %383 = vmatprep.mubr.f32.mxu0 0.0
        %384 = vmatmul.mubr.f32.gmra.mxu0 %v284
        %v385 = vpop.f32.mrf.mxu0
        %v386 = vadd.f32 0.0, %v385
        %v387 = vpop.f32.mrf.mxu0
        %388 = vmatprep.mubr.f32.mxu0 0.0
        %389 = vmatmul.mubr.f32.gmra.mxu0 %v287
        %v390 = vpop.f32.mrf.mxu0
        %v391 = vadd.f32 0.0, %v390
        %v392 = vpop.f32.mrf.mxu0
        %393 = vmatprep.mubr.f32.mxu0 0.0
        %394 = vmatmul.mubr.f32.gmra.mxu0 %v290
        %v395 = vpop.f32.mrf.mxu0
        %v396 = vadd.f32 0.0, %v395
        %v397 = vpop.f32.mrf.mxu0
        %398 = vmatprep.mubr.f32.mxu0 0.0
        %399 = vmatmul.mubr.f32.gmra.mxu0 %v293
        %v400 = vpop.f32.mrf.mxu0
        %v401 = vadd.f32 0.0, %v400
        %v402 = vpop.f32.mrf.mxu0
        %403 = vdwg.mxu0
        %vm404 = vcmask 261120
        %405 = vst.msk [vmem:[%s258] sm:$0xff] %vm404, %v366
        %406 = vst.msk [vmem:[%s258 + $0x8] sm:$0xff] %vm404, %v371
        %407 = vst.msk [vmem:[%s258 + $0x10] sm:$0xff] %vm404, %v376
        %408 = vst.msk [vmem:[%s258 + $0x18] sm:$0xff] %vm404, %v381
        %409 = vst.msk [vmem:[%s258 + $0x20] sm:$0xff] %vm404, %v386
        %410 = vst.msk [vmem:[%s258 + $0x28] sm:$0xff] %vm404, %v391
        %411 = vst.msk [vmem:[%s258 + $0x30] sm:$0xff] %vm404, %v396
        %412 = vst.msk [vmem:[%s258 + $0x38] sm:$0xff] %vm404, %v401
        %v413 = vsel %vm404, %v366, 0.0
        %v414 = vsel %vm404, %v371, 0.0
        %v415 = vadd.f32 %v413, %v414
        %v416 = vsel %vm404, %v376, 0.0
        %v417 = vadd.f32 %v415, %v416
        %v418 = vsel %vm404, %v381, 0.0
        %v419 = vadd.f32 %v417, %v418
        %v420 = vsel %vm404, %v386, 0.0
        %v421 = vadd.f32 %v419, %v420
        %v422 = vsel %vm404, %v391, 0.0
        %v423 = vadd.f32 %v421, %v422
        %v424 = vsel %vm404, %v396, 0.0
        %v425 = vadd.f32 %v423, %v424
        %v426 = vsel %vm404, %v401, 0.0
        %v427 = vadd.f32 %v425, %v426
        %v428 = vrot.slane %v427, 4
        %v429 = vadd.f32 %v427, %v428
        %v430 = vrot.slane %v429, 2
        %v431 = vadd.f32 %v429, %v430
        %v432 = vrot.slane %v431, 1
        %v433 = vadd.f32 %v431, %v432
        %vm434 = vcmask 253952
        %435 = vst.msk [vmem:[%s233] sm:$0x1] %vm434, %v433
        %v436 = vmul.f32 %v366, %v366
        %v437 = vmul.f32 %v371, %v371
        %v438 = vmul.f32 %v376, %v376
        %v439 = vmul.f32 %v381, %v381
        %v440 = vmul.f32 %v386, %v386
        %v441 = vmul.f32 %v391, %v391
        %v442 = vmul.f32 %v396, %v396
        %v443 = vmul.f32 %v401, %v401
        %v444 = vsel %vm404, %v436, 0.0
        %v445 = vsel %vm404, %v437, 0.0
        %v446 = vadd.f32 %v444, %v445
        %v447 = vsel %vm404, %v438, 0.0
        %v448 = vadd.f32 %v446, %v447
        %v449 = vsel %vm404, %v439, 0.0
        %v450 = vadd.f32 %v448, %v449
        %v451 = vsel %vm404, %v440, 0.0
        %v452 = vadd.f32 %v450, %v451
        %v453 = vsel %vm404, %v441, 0.0
        %v454 = vadd.f32 %v452, %v453
        %v455 = vsel %vm404, %v442, 0.0
        %v456 = vadd.f32 %v454, %v455
        %v457 = vsel %vm404, %v443, 0.0
        %v458 = vadd.f32 %v456, %v457
        %v459 = vrot.slane %v458, 4
        %v460 = vadd.f32 %v458, %v459
        %v461 = vrot.slane %v460, 2
        %v462 = vadd.f32 %v460, %v461
        %v463 = vrot.slane %v462, 1
        %v464 = vadd.f32 %v462, %v463
        %465 = vst.msk [vmem:[%s239] sm:$0x1] %vm434, %v464
        %s466 = smul.u32 8, %s27
        %p467 = scmp.lt.s32.totalorder %s26, 1
        %s468 = scalar_select %p467, %s26, 1
        %p469 = scmp.lt.s32.totalorder %s466, 15
        %s470 = scalar_select %p469, %s466, 15
        %s471 = smul.addr %s468, 16
        %s472 = sadd.s32 %s470, %s471
        %s473 = smul.addr %s472, 8
        %s474 = scalar_lea.vmem %s2, %s473
        %s475 = sand.u32 %s121, 1
        %s476 = scalar_lea.sflag [#allocation3], %s475
        %s477 = sand.u32 %s121, 1
        %s478 = scalar_lea.vmem [#allocation2], %s477
        %s479 = sand.u32 %s149, 1
        %s480 = scalar_lea.sflag [#allocation5], %s479
        %s481 = sand.u32 %s149, 1
        %s482 = scalar_lea.vmem [#allocation4], %s481
        // Predicated region
        $region29: #{tpu_custom_call.1} parent=27 // pred_check
          %p483 = pneg %p103
        $region30: #{tpu_custom_call.1} parent=27 // pred_check_branch
          %485 = sbr.rel (%p483) target = $region32
        $region31: #{tpu_custom_call.1} parent=27 // pred_region
          %s486 = smul.u32 8, %s27
        $region32: #{tpu_custom_call.1} parent=27 // pred_fallthru
          _
        // Predicated region
        $region33: #{tpu_custom_call.1} parent=27 // pred_check
          %p487 = pneg %p131
        $region34: #{tpu_custom_call.1} parent=27 // pred_check_branch
          %489 = sbr.rel (%p487) target = $region36
        $region35: #{tpu_custom_call.1} parent=27 // pred_region
          %s491 = ssub.s32 16, 16
          %492 = vsyncadd %s476, %s491
          %s493 = smul.addr %s26, 2
          %s494 = sadd.s32 %s27, %s493
          %s495 = smul.addr %s494, 16
          %s496 = scalar_lea.hbm %s3, %s495
          %s498 = sshll.u32 %s478, 4
          %s499 = int_to_ptr.vmem [resolvable:$true] %s498
          %501 = dma.vmem_to_hbm [thread:$0]  %s499, 16, %s496, %s476
        $region36: #{tpu_custom_call.1} parent=27 // pred_fallthru
          _
        // Predicated region
        $region37: #{tpu_custom_call.1} parent=27 // pred_check
          %p502 = pneg %p159
        $region38: #{tpu_custom_call.1} parent=27 // pred_check_branch
          %504 = sbr.rel (%p502) target = $region40
        $region39: #{tpu_custom_call.1} parent=27 // pred_region
          %s506 = ssub.s32 16, 16
          %507 = vsyncadd %s480, %s506
          %s508 = smul.addr %s26, 2
          %s509 = sadd.s32 %s27, %s508
          %s510 = smul.addr %s509, 16
          %s511 = scalar_lea.hbm %s4, %s510
          %s513 = sshll.u32 %s482, 4
          %s514 = int_to_ptr.vmem [resolvable:$true] %s513
          %516 = dma.vmem_to_hbm [thread:$0]  %s514, 16, %s511, %s480
        $region40: #{tpu_custom_call.1} parent=27 // pred_fallthru
          _
      $region28: #{tpu_custom_call.1} parent=5 // pred_fallthru
        _
      %p517 = scmp.le.s32.totalorder 2, %s17
      // Predicated region
      $region41: #{tpu_custom_call.1} parent=5 // pred_check
        %p518 = pneg %p517
      $region42: #{tpu_custom_call.1} parent=5 // pred_check_branch
        %520 = sbr.rel (%p518) target = $region44
      $region43: #{tpu_custom_call.1} parent=5 // pred_region
        %s521 = ssub.s32 %s17, 2
        // Predicated region
        $region45: #{tpu_custom_call.1} parent=43 // pred_check
          %p522 = pneg %p109
        $region46: #{tpu_custom_call.1} parent=43 // pred_check_branch
          %524 = sbr.rel (%p522) target = $region48
        $region47: #{tpu_custom_call.1} parent=43 // pred_region
          %s525 = smul.u32 8, %s29
          %p526 = scmp.lt.s32.totalorder %s28, 1
          %s527 = scalar_select %p526, %s28, 1
          %p528 = scmp.lt.s32.totalorder %s525, 15
          %s529 = scalar_select %p528, %s525, 15
          %s530 = smul.addr %s527, 16
          %s531 = sadd.s32 %s529, %s530
          %s532 = smul.addr %s531, 8
          %s533 = scalar_lea.vmem %s2, %s532
        $region48: #{tpu_custom_call.1} parent=43 // pred_fallthru
          _
        // Predicated region
        $region49: #{tpu_custom_call.1} parent=43 // pred_check
          %p534 = pneg %p137
        $region50: #{tpu_custom_call.1} parent=43 // pred_check_branch
          %536 = sbr.rel (%p534) target = $region52
        $region51: #{tpu_custom_call.1} parent=43 // pred_region
          %s537 = sand.u32 %s122, 1
          %s538 = scalar_lea.sflag [#allocation3], %s537
          %s539 = sand.u32 %s122, 1
          %s540 = scalar_lea.vmem [#allocation2], %s539
          %541 = dma.done %s538, 16
        $region52: #{tpu_custom_call.1} parent=43 // pred_fallthru
          _
        // Predicated region
        $region53: #{tpu_custom_call.1} parent=43 // pred_check
          %p542 = pneg %p165
        $region54: #{tpu_custom_call.1} parent=43 // pred_check_branch
          %544 = sbr.rel (%p542) target = $region56
        $region55: #{tpu_custom_call.1} parent=43 // pred_region
          %s545 = sand.u32 %s150, 1
          %s546 = scalar_lea.sflag [#allocation5], %s545
          %s547 = sand.u32 %s150, 1
          %s548 = scalar_lea.vmem [#allocation4], %s547
          %549 = dma.done %s546, 16
        $region56: #{tpu_custom_call.1} parent=43 // pred_fallthru
          _
      $region44: #{tpu_custom_call.1} parent=5 // pred_fallthru
        _
    $region6: #{tpu_custom_call.1} parent=1 // loop_footer
      %s21 = sadd.s32 1, %s17
    $region7: #{tpu_custom_call.1} parent=1 // loop_footer_branch
      %16 = sbr.rel target = $region3
    $region8: #{tpu_custom_call.1} parent=1 // loop_exit
      _
    %550 = vsyncpa [#allocation3], 1
    %s551 = scalar_lea.sflag [#allocation3], 1
    %552 = vsyncpa %s551, 1
    %553 = vsyncpa [#allocation5], 1
    %s554 = scalar_lea.sflag [#allocation5], 1
    %555 = vsyncpa %s554, 1

</llo_original>
